<compile_context>
chip_gen: v6e
topology: v6e:2x2x1
jax: 0.10.0
libtpu: 0.0.40
codegen_flags: <defaults>
</compile_context>

<pallas_src>
from functools import partial

import jax
import jax.numpy as jnp
from jax.experimental import pallas as pl
from jax.experimental.pallas import tpu as pltpu

DEFAULT_BINS = 10
DEFAULT_LOSS_WEIGHT = 1.0


def _round_up(x, m):
    return ((x + m - 1) // m) * m


def _ghmc_kernel(*refs, bins, loss_weight, has_mask):
    if has_mask:
        pred_ref, target_ref, mask_ref, loss_ref, cnt_ref, bsum_ref = refs
    else:
        pred_ref, target_ref, loss_ref, cnt_ref, bsum_ref = refs
        mask_ref = None

    t = pl.program_id(0)

    @pl.when(t == 0)
    def _init():
        for i in range(bins):
            cnt_ref[i] = jnp.float32(0.0)
            bsum_ref[i] = jnp.float32(0.0)

    pred = pred_ref[...].astype(jnp.float32)
    target = target_ref[...].astype(jnp.float32)

    # Gradient-norm proxy of the module: g = |pred - target| on the raw logits
    # (mirrors the provided module; it does not apply sigmoid to pred here).
    g = jnp.abs(pred - target)

    last_edge = jnp.float32(1.0 + 1e-6)  # edges[-1] of arange(bins+1)/bins, +1e-6

    # One-time bin index; validity and out-of-range (g >= last edge) folded in
    # as -1.  Replaces per-bin double compares + repeated `valid` ANDs.
    bin_idx = jnp.minimum(jnp.floor(g * bins).astype(jnp.int32), bins - 1)
    in_range = g < last_edge
    if has_mask:
        valid = mask_ref[...].astype(jnp.float32) > 0.0
        in_range = in_range & valid
    bin_idx = jnp.where(in_range, bin_idx, -1)

    # Unweighted BCE-with-logits; the per-bin scalar weights are applied to the
    # per-bin sums at the end (tot / num_in_bin / n are all scalars).
    bce = jnp.maximum(pred, 0.0) - pred * target + jnp.log1p(jnp.exp(-jnp.abs(pred)))

    # Static unroll over bins; per-bin scalar reductions ride the XLU slot and
    # accumulate into resident SMEM scratch across batch tiles.
    for i in range(bins):
        inds = (bin_idx == i).astype(jnp.float32)
        cnt_ref[i] = cnt_ref[i] + jnp.sum(inds)
        bsum_ref[i] = bsum_ref[i] + jnp.sum(bce * inds)

    @pl.when(t == pl.num_programs(0) - 1)
    def _finalize():
        total = jnp.float32(0.0)
        n = jnp.float32(0.0)
        for i in range(bins):
            c = cnt_ref[i]
            has = c > 0.0
            # weight_i = tot / c ; loss = sum_i weight_i * bsum_i / (n * tot)
            #          => tot cancels: bsum_i / c / n
            total = total + jnp.where(has, bsum_ref[i] / jnp.maximum(c, 1.0),
                                      jnp.float32(0.0))
            n = n + has.astype(jnp.float32)
        loss_ref[0, 0] = total * (jnp.float32(loss_weight) / jnp.maximum(n, 1.0))


def ghmc_loss(pred, target, mask_calc=None, *, bins=DEFAULT_BINS, momentum=0.0,
              loss_weight=DEFAULT_LOSS_WEIGHT, block_rows=512):
    """GHM-C loss forward on TPU via Pallas. pred/target[/mask]: [B, C] -> scalar."""
    if momentum != 0.0:
        # TODO(synk): momentum > 0 needs a persistent acc_sum EMA buffer.
        raise NotImplementedError("momentum > 0 not implemented")

    B, C = pred.shape
    Cp = _round_up(max(C, 1), 128)          # lane-dense last dim

    # Batch tile: 8-aligned, capped by block_rows and by a VMEM budget that
    # keeps 3 double-buffered f32 input streams under the smallest default
    # scoped-VMEM limit (v5e: 16 MiB).
    bytes_per_row = Cp * 4 * 3 * 2
    rows_budget = max(8, ((12 * 1024 * 1024) // bytes_per_row) // 8 * 8)
    tb = min(block_rows, rows_budget, _round_up(B, 8))
    tb = max(8, (tb // 8) * 8)
    Bp = _round_up(B, tb)

    need_pad = (Bp != B) or (Cp != C)
    has_mask = (mask_calc is not None) or need_pad

    if mask_calc is not None and mask_calc.dtype == jnp.bool_:
        mask_calc = mask_calc.astype(jnp.int8)   # keep HBM stream narrow

    if need_pad:
        pad = ((0, Bp - B), (0, Cp - C))
        pred = jnp.pad(pred, pad)
        target = jnp.pad(target, pad)
        if mask_calc is None:
            mask_calc = jnp.pad(jnp.ones((B, C), dtype=jnp.int8), pad)
        else:
            mask_calc = jnp.pad(mask_calc, pad)

    grid = (Bp // tb,)
    tile_spec = pl.BlockSpec((tb, Cp), lambda t: (t, 0))
    in_specs = [tile_spec, tile_spec] + ([tile_spec] if has_mask else [])
    inputs = (pred, target) + ((mask_calc,) if has_mask else ())

    kernel = partial(_ghmc_kernel, bins=bins, loss_weight=float(loss_weight),
                     has_mask=has_mask)
    out = pl.pallas_call(
        kernel,
        out_shape=jax.ShapeDtypeStruct((1, 1), jnp.float32),
        grid=grid,
        in_specs=in_specs,
        out_specs=pl.BlockSpec(memory_space=pltpu.MemorySpace.SMEM),
        scratch_shapes=[pltpu.SMEM((bins,), jnp.float32),   # per-bin counts
                        pltpu.SMEM((bins,), jnp.float32)],  # per-bin bce sums
        compiler_params=pltpu.CompilerParams(
            dimension_semantics=("arbitrary",)),
    )(*inputs)
    return out[0, 0]


def ghmc_reference(pred, target, mask_calc=None, *, bins=DEFAULT_BINS,
                   loss_weight=DEFAULT_LOSS_WEIGHT):
    """Pure-JAX mirror of the PyTorch forward (momentum == 0) for verification."""
    pred = pred.astype(jnp.float32)
    target = target.astype(jnp.float32)
    if mask_calc is None:
        mask_calc = jnp.ones_like(pred)
    mask = mask_calc.astype(jnp.float32)
    valid = mask > 0
    tot = jnp.maximum(jnp.sum(valid.astype(jnp.float32)), 1.0)
    g = jnp.abs(pred - target)
    edges = [float(i) / bins for i in range(bins + 1)]
    edges[-1] += 1e-6
    weights = jnp.zeros_like(pred)
    n = jnp.float32(0.0)
    for i in range(bins):
        inds = (g >= edges[i]) & (g < edges[i + 1]) & valid
        num_in_bin = jnp.sum(inds.astype(jnp.float32))
        has = num_in_bin > 0
        w_i = jnp.where(has, tot / jnp.maximum(num_in_bin, 1.0), 0.0)
        weights = weights + jnp.where(inds, w_i, 0.0)
        n = n + has.astype(jnp.float32)
    weights = jnp.where(n > 0, weights / jnp.maximum(n, 1.0), weights)
    bce = jnp.maximum(pred, 0.0) - pred * target + jnp.log1p(jnp.exp(-jnp.abs(pred)))
    return jnp.sum(bce * weights) / tot * loss_weight


if __name__ == "__main__":
    key = jax.random.PRNGKey(0)
    k1, k2, k3, k4, k5 = jax.random.split(key, 5)

    # 1) aligned shape, explicit mask (masked kernel, no padding)
    B, C = 16, 128
    pred = jax.random.normal(k1, (B, C), dtype=jnp.float32)
    target = (jax.random.uniform(k2, (B, C)) > 0.5).astype(jnp.float32)
    mask = (jax.random.uniform(k3, (B, C)) > 0.2).astype(jnp.float32)

    loss = ghmc_loss(pred, target, mask)
    jax.block_until_ready(loss)
    ref = ghmc_reference(pred, target, mask)
    assert jnp.allclose(loss, ref, rtol=1e-4, atol=1e-5), (float(loss), float(ref))

    # 2) aligned shape, no mask (mask-less fast path: 2 HBM streams)
    loss_nm = ghmc_loss(pred, target)
    jax.block_until_ready(loss_nm)
    ref_nm = ghmc_reference(pred, target)
    assert jnp.allclose(loss_nm, ref_nm, rtol=1e-4, atol=1e-5), (float(loss_nm), float(ref_nm))

    # 3) unaligned shape (exercises lane / batch padding with generated mask)
    B2, C2 = 10, 80
    pred2 = jax.random.normal(k4, (B2, C2), dtype=jnp.float32)
    target2 = (jax.random.uniform(k5, (B2, C2)) > 0.5).astype(jnp.float32)
    loss2 = ghmc_loss(pred2, target2)
    jax.block_until_ready(loss2)
    ref2 = ghmc_reference(pred2, target2)
    assert jnp.allclose(loss2, ref2, rtol=1e-4, atol=1e-5), (float(loss2), float(ref2))

    print("KERNEL_OK")
</pallas_src>

<mosaic_0001>
module attributes {stable_mosaic.version = 11 : i64} {
  func.func @_ghmc_kernel(%arg0: i32, %arg1: memref<16x128xf32, #tpu.memory_space<vmem>>, %arg2: memref<16x128xf32, #tpu.memory_space<vmem>>, %arg3: memref<16x128xf32, #tpu.memory_space<vmem>>, %arg4: memref<1x1xf32, #tpu.memory_space<smem>>, %arg5: memref<10xf32, #tpu.memory_space<smem>>, %arg6: memref<10xf32, #tpu.memory_space<smem>>) attributes {dimension_semantics = [#tpu.dimension_semantics<arbitrary>], iteration_bounds = array<i64: 1>, scalar_prefetch = 0 : i64, scratch_operands = 2 : i64, tpu.core_type = #tpu.core_type<tc>, window_params = [{transform_indices = @transform_0, window_bounds = array<i64: 16, 128>}, {transform_indices = @transform_1, window_bounds = array<i64: 16, 128>}, {transform_indices = @transform_2, window_bounds = array<i64: 16, 128>}, {transform_indices = @transform_3, window_bounds = array<i64: 1, 1>}]} {
    %c0_i32 = arith.constant 0 : i32
    %0 = arith.cmpi eq, %arg0, %c0_i32 : i32
    %1 = arith.extui %0 : i1 to i32
    %c0_i32_0 = arith.constant 0 : i32
    %2 = arith.cmpi ne, %1, %c0_i32_0 : i32
    scf.if %2 {
      %cst_65 = arith.constant 0.000000e+00 : f32
      %c0_66 = arith.constant 0 : index
      %224 = memref.load %arg5[%c0_66] : memref<10xf32, #tpu.memory_space<smem>>
      memref.store %cst_65, %arg5[%c0_66] : memref<10xf32, #tpu.memory_space<smem>>
      %cst_67 = arith.constant 0.000000e+00 : f32
      %c0_68 = arith.constant 0 : index
      %225 = memref.load %arg6[%c0_68] : memref<10xf32, #tpu.memory_space<smem>>
      memref.store %cst_67, %arg6[%c0_68] : memref<10xf32, #tpu.memory_space<smem>>
      %cst_69 = arith.constant 0.000000e+00 : f32
      %c1_70 = arith.constant 1 : index
      %226 = memref.load %arg5[%c1_70] : memref<10xf32, #tpu.memory_space<smem>>
      memref.store %cst_69, %arg5[%c1_70] : memref<10xf32, #tpu.memory_space<smem>>
      %cst_71 = arith.constant 0.000000e+00 : f32
      %c1_72 = arith.constant 1 : index
      %227 = memref.load %arg6[%c1_72] : memref<10xf32, #tpu.memory_space<smem>>
      memref.store %cst_71, %arg6[%c1_72] : memref<10xf32, #tpu.memory_space<smem>>
      %cst_73 = arith.constant 0.000000e+00 : f32
      %c2_74 = arith.constant 2 : index
      %228 = memref.load %arg5[%c2_74] : memref<10xf32, #tpu.memory_space<smem>>
      memref.store %cst_73, %arg5[%c2_74] : memref<10xf32, #tpu.memory_space<smem>>
      %cst_75 = arith.constant 0.000000e+00 : f32
      %c2_76 = arith.constant 2 : index
      %229 = memref.load %arg6[%c2_76] : memref<10xf32, #tpu.memory_space<smem>>
      memref.store %cst_75, %arg6[%c2_76] : memref<10xf32, #tpu.memory_space<smem>>
      %cst_77 = arith.constant 0.000000e+00 : f32
      %c3_78 = arith.constant 3 : index
      %230 = memref.load %arg5[%c3_78] : memref<10xf32, #tpu.memory_space<smem>>
      memref.store %cst_77, %arg5[%c3_78] : memref<10xf32, #tpu.memory_space<smem>>
      %cst_79 = arith.constant 0.000000e+00 : f32
      %c3_80 = arith.constant 3 : index
      %231 = memref.load %arg6[%c3_80] : memref<10xf32, #tpu.memory_space<smem>>
      memref.store %cst_79, %arg6[%c3_80] : memref<10xf32, #tpu.memory_space<smem>>
      %cst_81 = arith.constant 0.000000e+00 : f32
      %c4_82 = arith.constant 4 : index
      %232 = memref.load %arg5[%c4_82] : memref<10xf32, #tpu.memory_space<smem>>
      memref.store %cst_81, %arg5[%c4_82] : memref<10xf32, #tpu.memory_space<smem>>
      %cst_83 = arith.constant 0.000000e+00 : f32
      %c4_84 = arith.constant 4 : index
      %233 = memref.load %arg6[%c4_84] : memref<10xf32, #tpu.memory_space<smem>>
      memref.store %cst_83, %arg6[%c4_84] : memref<10xf32, #tpu.memory_space<smem>>
      %cst_85 = arith.constant 0.000000e+00 : f32
      %c5_86 = arith.constant 5 : index
      %234 = memref.load %arg5[%c5_86] : memref<10xf32, #tpu.memory_space<smem>>
      memref.store %cst_85, %arg5[%c5_86] : memref<10xf32, #tpu.memory_space<smem>>
      %cst_87 = arith.constant 0.000000e+00 : f32
      %c5_88 = arith.constant 5 : index
      %235 = memref.load %arg6[%c5_88] : memref<10xf32, #tpu.memory_space<smem>>
      memref.store %cst_87, %arg6[%c5_88] : memref<10xf32, #tpu.memory_space<smem>>
      %cst_89 = arith.constant 0.000000e+00 : f32
      %c6_90 = arith.constant 6 : index
      %236 = memref.load %arg5[%c6_90] : memref<10xf32, #tpu.memory_space<smem>>
      memref.store %cst_89, %arg5[%c6_90] : memref<10xf32, #tpu.memory_space<smem>>
      %cst_91 = arith.constant 0.000000e+00 : f32
      %c6_92 = arith.constant 6 : index
      %237 = memref.load %arg6[%c6_92] : memref<10xf32, #tpu.memory_space<smem>>
      memref.store %cst_91, %arg6[%c6_92] : memref<10xf32, #tpu.memory_space<smem>>
      %cst_93 = arith.constant 0.000000e+00 : f32
      %c7_94 = arith.constant 7 : index
      %238 = memref.load %arg5[%c7_94] : memref<10xf32, #tpu.memory_space<smem>>
      memref.store %cst_93, %arg5[%c7_94] : memref<10xf32, #tpu.memory_space<smem>>
      %cst_95 = arith.constant 0.000000e+00 : f32
      %c7_96 = arith.constant 7 : index
      %239 = memref.load %arg6[%c7_96] : memref<10xf32, #tpu.memory_space<smem>>
      memref.store %cst_95, %arg6[%c7_96] : memref<10xf32, #tpu.memory_space<smem>>
      %cst_97 = arith.constant 0.000000e+00 : f32
      %c8_98 = arith.constant 8 : index
      %240 = memref.load %arg5[%c8_98] : memref<10xf32, #tpu.memory_space<smem>>
      memref.store %cst_97, %arg5[%c8_98] : memref<10xf32, #tpu.memory_space<smem>>
      %cst_99 = arith.constant 0.000000e+00 : f32
      %c8_100 = arith.constant 8 : index
      %241 = memref.load %arg6[%c8_100] : memref<10xf32, #tpu.memory_space<smem>>
      memref.store %cst_99, %arg6[%c8_100] : memref<10xf32, #tpu.memory_space<smem>>
      %cst_101 = arith.constant 0.000000e+00 : f32
      %c9_102 = arith.constant 9 : index
      %242 = memref.load %arg5[%c9_102] : memref<10xf32, #tpu.memory_space<smem>>
      memref.store %cst_101, %arg5[%c9_102] : memref<10xf32, #tpu.memory_space<smem>>
      %cst_103 = arith.constant 0.000000e+00 : f32
      %c9_104 = arith.constant 9 : index
      %243 = memref.load %arg6[%c9_104] : memref<10xf32, #tpu.memory_space<smem>>
      memref.store %cst_103, %arg6[%c9_104] : memref<10xf32, #tpu.memory_space<smem>>
    } else {
    }
    %c0 = arith.constant 0 : index
    %c0_1 = arith.constant 0 : index
    %3 = vector.load %arg1[%c0, %c0_1] : memref<16x128xf32, #tpu.memory_space<vmem>>, vector<16x128xf32>
    %c0_2 = arith.constant 0 : index
    %c0_3 = arith.constant 0 : index
    %4 = vector.load %arg2[%c0_2, %c0_3] : memref<16x128xf32, #tpu.memory_space<vmem>>, vector<16x128xf32>
    %5 = arith.subf %3, %4 : vector<16x128xf32>
    %6 = math.absf %5 : vector<16x128xf32>
    %cst = arith.constant 1.000000e+01 : f32
    %7 = vector.broadcast %cst : f32 to vector<16x128xf32>
    %8 = arith.mulf %6, %7 : vector<16x128xf32>
    %9 = math.floor %8 : vector<16x128xf32>
    %10 = arith.fptosi %9 : vector<16x128xf32> to vector<16x128xi32>
    %c9_i32 = arith.constant 9 : i32
    %11 = vector.broadcast %c9_i32 : i32 to vector<16x128xi32>
    %12 = arith.minsi %10, %11 : vector<16x128xi32>
    %cst_4 = arith.constant 1.00000095 : f32
    %13 = vector.broadcast %cst_4 : f32 to vector<16x128xf32>
    %14 = arith.cmpf olt, %6, %13 : vector<16x128xf32>
    %c0_5 = arith.constant 0 : index
    %c0_6 = arith.constant 0 : index
    %15 = vector.load %arg3[%c0_5, %c0_6] : memref<16x128xf32, #tpu.memory_space<vmem>>, vector<16x128xf32>
    %cst_7 = arith.constant 0.000000e+00 : f32
    %16 = vector.broadcast %cst_7 : f32 to vector<16x128xf32>
    %17 = arith.cmpf ogt, %15, %16 : vector<16x128xf32>
    %18 = arith.andi %14, %17 : vector<16x128xi1>
    %c-1_i32 = arith.constant -1 : i32
    %19 = vector.broadcast %c-1_i32 : i32 to vector<16x128xi32>
    %20 = arith.select %18, %12, %19 : vector<16x128xi1>, vector<16x128xi32>
    %cst_8 = arith.constant 0.000000e+00 : f32
    %21 = vector.broadcast %cst_8 : f32 to vector<16x128xf32>
    %22 = arith.maximumf %3, %21 : vector<16x128xf32>
    %23 = arith.mulf %3, %4 : vector<16x128xf32>
    %24 = arith.subf %22, %23 : vector<16x128xf32>
    %25 = math.absf %3 : vector<16x128xf32>
    %cst_9 = arith.constant 0.000000e+00 : f32
    %26 = vector.broadcast %cst_9 : f32 to vector<16x128xf32>
    %27 = arith.subf %26, %25 : vector<16x128xf32>
    %28 = math.exp %27 : vector<16x128xf32>
    %29 = math.log1p %28 : vector<16x128xf32>
    %30 = arith.addf %24, %29 : vector<16x128xf32>
    %c0_i32_10 = arith.constant 0 : i32
    %31 = vector.broadcast %c0_i32_10 : i32 to vector<16x128xi32>
    %32 = arith.cmpi eq, %20, %31 : vector<16x128xi32>
    %33 = arith.extui %32 : vector<16x128xi1> to vector<16x128xi32>
    %34 = arith.sitofp %33 : vector<16x128xi32> to vector<16x128xf32>
    %c0_11 = arith.constant 0 : index
    %35 = memref.load %arg5[%c0_11] : memref<10xf32, #tpu.memory_space<smem>>
    %36 = vector.shape_cast %34 : vector<16x128xf32> to vector<1x16x128xf32>
    %cst_12 = arith.constant dense<0.000000e+00> : vector<1xf32>
    %37 = vector.multi_reduction <add>, %36, %cst_12 [1, 2] : vector<1x16x128xf32> to vector<1xf32>
    %38 = vector.shape_cast %37 : vector<1xf32> to vector<1x1x1xf32>
    %39 = vector.extract %38[0, 0, 0] : f32 from vector<1x1x1xf32>
    %40 = arith.addf %35, %39 : f32
    %c0_13 = arith.constant 0 : index
    %41 = memref.load %arg5[%c0_13] : memref<10xf32, #tpu.memory_space<smem>>
    memref.store %40, %arg5[%c0_13] : memref<10xf32, #tpu.memory_space<smem>>
    %c0_14 = arith.constant 0 : index
    %42 = memref.load %arg6[%c0_14] : memref<10xf32, #tpu.memory_space<smem>>
    %43 = arith.mulf %30, %34 : vector<16x128xf32>
    %44 = vector.shape_cast %43 : vector<16x128xf32> to vector<1x16x128xf32>
    %cst_15 = arith.constant dense<0.000000e+00> : vector<1xf32>
    %45 = vector.multi_reduction <add>, %44, %cst_15 [1, 2] : vector<1x16x128xf32> to vector<1xf32>
    %46 = vector.shape_cast %45 : vector<1xf32> to vector<1x1x1xf32>
    %47 = vector.extract %46[0, 0, 0] : f32 from vector<1x1x1xf32>
    %48 = arith.addf %42, %47 : f32
    %c0_16 = arith.constant 0 : index
    %49 = memref.load %arg6[%c0_16] : memref<10xf32, #tpu.memory_space<smem>>
    memref.store %48, %arg6[%c0_16] : memref<10xf32, #tpu.memory_space<smem>>
    %c1_i32 = arith.constant 1 : i32
    %50 = vector.broadcast %c1_i32 : i32 to vector<16x128xi32>
    %51 = arith.cmpi eq, %20, %50 : vector<16x128xi32>
    %52 = arith.extui %51 : vector<16x128xi1> to vector<16x128xi32>
    %53 = arith.sitofp %52 : vector<16x128xi32> to vector<16x128xf32>
    %c1 = arith.constant 1 : index
    %54 = memref.load %arg5[%c1] : memref<10xf32, #tpu.memory_space<smem>>
    %55 = vector.shape_cast %53 : vector<16x128xf32> to vector<1x16x128xf32>
    %cst_17 = arith.constant dense<0.000000e+00> : vector<1xf32>
    %56 = vector.multi_reduction <add>, %55, %cst_17 [1, 2] : vector<1x16x128xf32> to vector<1xf32>
    %57 = vector.shape_cast %56 : vector<1xf32> to vector<1x1x1xf32>
    %58 = vector.extract %57[0, 0, 0] : f32 from vector<1x1x1xf32>
    %59 = arith.addf %54, %58 : f32
    %c1_18 = arith.constant 1 : index
    %60 = memref.load %arg5[%c1_18] : memref<10xf32, #tpu.memory_space<smem>>
    memref.store %59, %arg5[%c1_18] : memref<10xf32, #tpu.memory_space<smem>>
    %c1_19 = arith.constant 1 : index
    %61 = memref.load %arg6[%c1_19] : memref<10xf32, #tpu.memory_space<smem>>
    %62 = arith.mulf %30, %53 : vector<16x128xf32>
    %63 = vector.shape_cast %62 : vector<16x128xf32> to vector<1x16x128xf32>
    %cst_20 = arith.constant dense<0.000000e+00> : vector<1xf32>
    %64 = vector.multi_reduction <add>, %63, %cst_20 [1, 2] : vector<1x16x128xf32> to vector<1xf32>
    %65 = vector.shape_cast %64 : vector<1xf32> to vector<1x1x1xf32>
    %66 = vector.extract %65[0, 0, 0] : f32 from vector<1x1x1xf32>
    %67 = arith.addf %61, %66 : f32
    %c1_21 = arith.constant 1 : index
    %68 = memref.load %arg6[%c1_21] : memref<10xf32, #tpu.memory_space<smem>>
    memref.store %67, %arg6[%c1_21] : memref<10xf32, #tpu.memory_space<smem>>
    %c2_i32 = arith.constant 2 : i32
    %69 = vector.broadcast %c2_i32 : i32 to vector<16x128xi32>
    %70 = arith.cmpi eq, %20, %69 : vector<16x128xi32>
    %71 = arith.extui %70 : vector<16x128xi1> to vector<16x128xi32>
    %72 = arith.sitofp %71 : vector<16x128xi32> to vector<16x128xf32>
    %c2 = arith.constant 2 : index
    %73 = memref.load %arg5[%c2] : memref<10xf32, #tpu.memory_space<smem>>
    %74 = vector.shape_cast %72 : vector<16x128xf32> to vector<1x16x128xf32>
    %cst_22 = arith.constant dense<0.000000e+00> : vector<1xf32>
    %75 = vector.multi_reduction <add>, %74, %cst_22 [1, 2] : vector<1x16x128xf32> to vector<1xf32>
    %76 = vector.shape_cast %75 : vector<1xf32> to vector<1x1x1xf32>
    %77 = vector.extract %76[0, 0, 0] : f32 from vector<1x1x1xf32>
    %78 = arith.addf %73, %77 : f32
    %c2_23 = arith.constant 2 : index
    %79 = memref.load %arg5[%c2_23] : memref<10xf32, #tpu.memory_space<smem>>
    memref.store %78, %arg5[%c2_23] : memref<10xf32, #tpu.memory_space<smem>>
    %c2_24 = arith.constant 2 : index
    %80 = memref.load %arg6[%c2_24] : memref<10xf32, #tpu.memory_space<smem>>
    %81 = arith.mulf %30, %72 : vector<16x128xf32>
    %82 = vector.shape_cast %81 : vector<16x128xf32> to vector<1x16x128xf32>
    %cst_25 = arith.constant dense<0.000000e+00> : vector<1xf32>
    %83 = vector.multi_reduction <add>, %82, %cst_25 [1, 2] : vector<1x16x128xf32> to vector<1xf32>
    %84 = vector.shape_cast %83 : vector<1xf32> to vector<1x1x1xf32>
    %85 = vector.extract %84[0, 0, 0] : f32 from vector<1x1x1xf32>
    %86 = arith.addf %80, %85 : f32
    %c2_26 = arith.constant 2 : index
    %87 = memref.load %arg6[%c2_26] : memref<10xf32, #tpu.memory_space<smem>>
    memref.store %86, %arg6[%c2_26] : memref<10xf32, #tpu.memory_space<smem>>
    %c3_i32 = arith.constant 3 : i32
    %88 = vector.broadcast %c3_i32 : i32 to vector<16x128xi32>
    %89 = arith.cmpi eq, %20, %88 : vector<16x128xi32>
    %90 = arith.extui %89 : vector<16x128xi1> to vector<16x128xi32>
    %91 = arith.sitofp %90 : vector<16x128xi32> to vector<16x128xf32>
    %c3 = arith.constant 3 : index
    %92 = memref.load %arg5[%c3] : memref<10xf32, #tpu.memory_space<smem>>
    %93 = vector.shape_cast %91 : vector<16x128xf32> to vector<1x16x128xf32>
    %cst_27 = arith.constant dense<0.000000e+00> : vector<1xf32>
    %94 = vector.multi_reduction <add>, %93, %cst_27 [1, 2] : vector<1x16x128xf32> to vector<1xf32>
    %95 = vector.shape_cast %94 : vector<1xf32> to vector<1x1x1xf32>
    %96 = vector.extract %95[0, 0, 0] : f32 from vector<1x1x1xf32>
    %97 = arith.addf %92, %96 : f32
    %c3_28 = arith.constant 3 : index
    %98 = memref.load %arg5[%c3_28] : memref<10xf32, #tpu.memory_space<smem>>
    memref.store %97, %arg5[%c3_28] : memref<10xf32, #tpu.memory_space<smem>>
    %c3_29 = arith.constant 3 : index
    %99 = memref.load %arg6[%c3_29] : memref<10xf32, #tpu.memory_space<smem>>
    %100 = arith.mulf %30, %91 : vector<16x128xf32>
    %101 = vector.shape_cast %100 : vector<16x128xf32> to vector<1x16x128xf32>
    %cst_30 = arith.constant dense<0.000000e+00> : vector<1xf32>
    %102 = vector.multi_reduction <add>, %101, %cst_30 [1, 2] : vector<1x16x128xf32> to vector<1xf32>
    %103 = vector.shape_cast %102 : vector<1xf32> to vector<1x1x1xf32>
    %104 = vector.extract %103[0, 0, 0] : f32 from vector<1x1x1xf32>
    %105 = arith.addf %99, %104 : f32
    %c3_31 = arith.constant 3 : index
    %106 = memref.load %arg6[%c3_31] : memref<10xf32, #tpu.memory_space<smem>>
    memref.store %105, %arg6[%c3_31] : memref<10xf32, #tpu.memory_space<smem>>
    %c4_i32 = arith.constant 4 : i32
    %107 = vector.broadcast %c4_i32 : i32 to vector<16x128xi32>
    %108 = arith.cmpi eq, %20, %107 : vector<16x128xi32>
    %109 = arith.extui %108 : vector<16x128xi1> to vector<16x128xi32>
    %110 = arith.sitofp %109 : vector<16x128xi32> to vector<16x128xf32>
    %c4 = arith.constant 4 : index
    %111 = memref.load %arg5[%c4] : memref<10xf32, #tpu.memory_space<smem>>
    %112 = vector.shape_cast %110 : vector<16x128xf32> to vector<1x16x128xf32>
    %cst_32 = arith.constant dense<0.000000e+00> : vector<1xf32>
    %113 = vector.multi_reduction <add>, %112, %cst_32 [1, 2] : vector<1x16x128xf32> to vector<1xf32>
    %114 = vector.shape_cast %113 : vector<1xf32> to vector<1x1x1xf32>
    %115 = vector.extract %114[0, 0, 0] : f32 from vector<1x1x1xf32>
    %116 = arith.addf %111, %115 : f32
    %c4_33 = arith.constant 4 : index
    %117 = memref.load %arg5[%c4_33] : memref<10xf32, #tpu.memory_space<smem>>
    memref.store %116, %arg5[%c4_33] : memref<10xf32, #tpu.memory_space<smem>>
    %c4_34 = arith.constant 4 : index
    %118 = memref.load %arg6[%c4_34] : memref<10xf32, #tpu.memory_space<smem>>
    %119 = arith.mulf %30, %110 : vector<16x128xf32>
    %120 = vector.shape_cast %119 : vector<16x128xf32> to vector<1x16x128xf32>
    %cst_35 = arith.constant dense<0.000000e+00> : vector<1xf32>
    %121 = vector.multi_reduction <add>, %120, %cst_35 [1, 2] : vector<1x16x128xf32> to vector<1xf32>
    %122 = vector.shape_cast %121 : vector<1xf32> to vector<1x1x1xf32>
    %123 = vector.extract %122[0, 0, 0] : f32 from vector<1x1x1xf32>
    %124 = arith.addf %118, %123 : f32
    %c4_36 = arith.constant 4 : index
    %125 = memref.load %arg6[%c4_36] : memref<10xf32, #tpu.memory_space<smem>>
    memref.store %124, %arg6[%c4_36] : memref<10xf32, #tpu.memory_space<smem>>
    %c5_i32 = arith.constant 5 : i32
    %126 = vector.broadcast %c5_i32 : i32 to vector<16x128xi32>
    %127 = arith.cmpi eq, %20, %126 : vector<16x128xi32>
    %128 = arith.extui %127 : vector<16x128xi1> to vector<16x128xi32>
    %129 = arith.sitofp %128 : vector<16x128xi32> to vector<16x128xf32>
    %c5 = arith.constant 5 : index
    %130 = memref.load %arg5[%c5] : memref<10xf32, #tpu.memory_space<smem>>
    %131 = vector.shape_cast %129 : vector<16x128xf32> to vector<1x16x128xf32>
    %cst_37 = arith.constant dense<0.000000e+00> : vector<1xf32>
    %132 = vector.multi_reduction <add>, %131, %cst_37 [1, 2] : vector<1x16x128xf32> to vector<1xf32>
    %133 = vector.shape_cast %132 : vector<1xf32> to vector<1x1x1xf32>
    %134 = vector.extract %133[0, 0, 0] : f32 from vector<1x1x1xf32>
    %135 = arith.addf %130, %134 : f32
    %c5_38 = arith.constant 5 : index
    %136 = memref.load %arg5[%c5_38] : memref<10xf32, #tpu.memory_space<smem>>
    memref.store %135, %arg5[%c5_38] : memref<10xf32, #tpu.memory_space<smem>>
    %c5_39 = arith.constant 5 : index
    %137 = memref.load %arg6[%c5_39] : memref<10xf32, #tpu.memory_space<smem>>
    %138 = arith.mulf %30, %129 : vector<16x128xf32>
    %139 = vector.shape_cast %138 : vector<16x128xf32> to vector<1x16x128xf32>
    %cst_40 = arith.constant dense<0.000000e+00> : vector<1xf32>
    %140 = vector.multi_reduction <add>, %139, %cst_40 [1, 2] : vector<1x16x128xf32> to vector<1xf32>
    %141 = vector.shape_cast %140 : vector<1xf32> to vector<1x1x1xf32>
    %142 = vector.extract %141[0, 0, 0] : f32 from vector<1x1x1xf32>
    %143 = arith.addf %137, %142 : f32
    %c5_41 = arith.constant 5 : index
    %144 = memref.load %arg6[%c5_41] : memref<10xf32, #tpu.memory_space<smem>>
    memref.store %143, %arg6[%c5_41] : memref<10xf32, #tpu.memory_space<smem>>
    %c6_i32 = arith.constant 6 : i32
    %145 = vector.broadcast %c6_i32 : i32 to vector<16x128xi32>
    %146 = arith.cmpi eq, %20, %145 : vector<16x128xi32>
    %147 = arith.extui %146 : vector<16x128xi1> to vector<16x128xi32>
    %148 = arith.sitofp %147 : vector<16x128xi32> to vector<16x128xf32>
    %c6 = arith.constant 6 : index
    %149 = memref.load %arg5[%c6] : memref<10xf32, #tpu.memory_space<smem>>
    %150 = vector.shape_cast %148 : vector<16x128xf32> to vector<1x16x128xf32>
    %cst_42 = arith.constant dense<0.000000e+00> : vector<1xf32>
    %151 = vector.multi_reduction <add>, %150, %cst_42 [1, 2] : vector<1x16x128xf32> to vector<1xf32>
    %152 = vector.shape_cast %151 : vector<1xf32> to vector<1x1x1xf32>
    %153 = vector.extract %152[0, 0, 0] : f32 from vector<1x1x1xf32>
    %154 = arith.addf %149, %153 : f32
    %c6_43 = arith.constant 6 : index
    %155 = memref.load %arg5[%c6_43] : memref<10xf32, #tpu.memory_space<smem>>
    memref.store %154, %arg5[%c6_43] : memref<10xf32, #tpu.memory_space<smem>>
    %c6_44 = arith.constant 6 : index
    %156 = memref.load %arg6[%c6_44] : memref<10xf32, #tpu.memory_space<smem>>
    %157 = arith.mulf %30, %148 : vector<16x128xf32>
    %158 = vector.shape_cast %157 : vector<16x128xf32> to vector<1x16x128xf32>
    %cst_45 = arith.constant dense<0.000000e+00> : vector<1xf32>
    %159 = vector.multi_reduction <add>, %158, %cst_45 [1, 2] : vector<1x16x128xf32> to vector<1xf32>
    %160 = vector.shape_cast %159 : vector<1xf32> to vector<1x1x1xf32>
    %161 = vector.extract %160[0, 0, 0] : f32 from vector<1x1x1xf32>
    %162 = arith.addf %156, %161 : f32
    %c6_46 = arith.constant 6 : index
    %163 = memref.load %arg6[%c6_46] : memref<10xf32, #tpu.memory_space<smem>>
    memref.store %162, %arg6[%c6_46] : memref<10xf32, #tpu.memory_space<smem>>
    %c7_i32 = arith.constant 7 : i32
    %164 = vector.broadcast %c7_i32 : i32 to vector<16x128xi32>
    %165 = arith.cmpi eq, %20, %164 : vector<16x128xi32>
    %166 = arith.extui %165 : vector<16x128xi1> to vector<16x128xi32>
    %167 = arith.sitofp %166 : vector<16x128xi32> to vector<16x128xf32>
    %c7 = arith.constant 7 : index
    %168 = memref.load %arg5[%c7] : memref<10xf32, #tpu.memory_space<smem>>
    %169 = vector.shape_cast %167 : vector<16x128xf32> to vector<1x16x128xf32>
    %cst_47 = arith.constant dense<0.000000e+00> : vector<1xf32>
    %170 = vector.multi_reduction <add>, %169, %cst_47 [1, 2] : vector<1x16x128xf32> to vector<1xf32>
    %171 = vector.shape_cast %170 : vector<1xf32> to vector<1x1x1xf32>
    %172 = vector.extract %171[0, 0, 0] : f32 from vector<1x1x1xf32>
    %173 = arith.addf %168, %172 : f32
    %c7_48 = arith.constant 7 : index
    %174 = memref.load %arg5[%c7_48] : memref<10xf32, #tpu.memory_space<smem>>
    memref.store %173, %arg5[%c7_48] : memref<10xf32, #tpu.memory_space<smem>>
    %c7_49 = arith.constant 7 : index
    %175 = memref.load %arg6[%c7_49] : memref<10xf32, #tpu.memory_space<smem>>
    %176 = arith.mulf %30, %167 : vector<16x128xf32>
    %177 = vector.shape_cast %176 : vector<16x128xf32> to vector<1x16x128xf32>
    %cst_50 = arith.constant dense<0.000000e+00> : vector<1xf32>
    %178 = vector.multi_reduction <add>, %177, %cst_50 [1, 2] : vector<1x16x128xf32> to vector<1xf32>
    %179 = vector.shape_cast %178 : vector<1xf32> to vector<1x1x1xf32>
    %180 = vector.extract %179[0, 0, 0] : f32 from vector<1x1x1xf32>
    %181 = arith.addf %175, %180 : f32
    %c7_51 = arith.constant 7 : index
    %182 = memref.load %arg6[%c7_51] : memref<10xf32, #tpu.memory_space<smem>>
    memref.store %181, %arg6[%c7_51] : memref<10xf32, #tpu.memory_space<smem>>
    %c8_i32 = arith.constant 8 : i32
    %183 = vector.broadcast %c8_i32 : i32 to vector<16x128xi32>
    %184 = arith.cmpi eq, %20, %183 : vector<16x128xi32>
    %185 = arith.extui %184 : vector<16x128xi1> to vector<16x128xi32>
    %186 = arith.sitofp %185 : vector<16x128xi32> to vector<16x128xf32>
    %c8 = arith.constant 8 : index
    %187 = memref.load %arg5[%c8] : memref<10xf32, #tpu.memory_space<smem>>
    %188 = vector.shape_cast %186 : vector<16x128xf32> to vector<1x16x128xf32>
    %cst_52 = arith.constant dense<0.000000e+00> : vector<1xf32>
    %189 = vector.multi_reduction <add>, %188, %cst_52 [1, 2] : vector<1x16x128xf32> to vector<1xf32>
    %190 = vector.shape_cast %189 : vector<1xf32> to vector<1x1x1xf32>
    %191 = vector.extract %190[0, 0, 0] : f32 from vector<1x1x1xf32>
    %192 = arith.addf %187, %191 : f32
    %c8_53 = arith.constant 8 : index
    %193 = memref.load %arg5[%c8_53] : memref<10xf32, #tpu.memory_space<smem>>
    memref.store %192, %arg5[%c8_53] : memref<10xf32, #tpu.memory_space<smem>>
    %c8_54 = arith.constant 8 : index
    %194 = memref.load %arg6[%c8_54] : memref<10xf32, #tpu.memory_space<smem>>
    %195 = arith.mulf %30, %186 : vector<16x128xf32>
    %196 = vector.shape_cast %195 : vector<16x128xf32> to vector<1x16x128xf32>
    %cst_55 = arith.constant dense<0.000000e+00> : vector<1xf32>
    %197 = vector.multi_reduction <add>, %196, %cst_55 [1, 2] : vector<1x16x128xf32> to vector<1xf32>
    %198 = vector.shape_cast %197 : vector<1xf32> to vector<1x1x1xf32>
    %199 = vector.extract %198[0, 0, 0] : f32 from vector<1x1x1xf32>
    %200 = arith.addf %194, %199 : f32
    %c8_56 = arith.constant 8 : index
    %201 = memref.load %arg6[%c8_56] : memref<10xf32, #tpu.memory_space<smem>>
    memref.store %200, %arg6[%c8_56] : memref<10xf32, #tpu.memory_space<smem>>
    %c9_i32_57 = arith.constant 9 : i32
    %202 = vector.broadcast %c9_i32_57 : i32 to vector<16x128xi32>
    %203 = arith.cmpi eq, %20, %202 : vector<16x128xi32>
    %204 = arith.extui %203 : vector<16x128xi1> to vector<16x128xi32>
    %205 = arith.sitofp %204 : vector<16x128xi32> to vector<16x128xf32>
    %c9 = arith.constant 9 : index
    %206 = memref.load %arg5[%c9] : memref<10xf32, #tpu.memory_space<smem>>
    %207 = vector.shape_cast %205 : vector<16x128xf32> to vector<1x16x128xf32>
    %cst_58 = arith.constant dense<0.000000e+00> : vector<1xf32>
    %208 = vector.multi_reduction <add>, %207, %cst_58 [1, 2] : vector<1x16x128xf32> to vector<1xf32>
    %209 = vector.shape_cast %208 : vector<1xf32> to vector<1x1x1xf32>
    %210 = vector.extract %209[0, 0, 0] : f32 from vector<1x1x1xf32>
    %211 = arith.addf %206, %210 : f32
    %c9_59 = arith.constant 9 : index
    %212 = memref.load %arg5[%c9_59] : memref<10xf32, #tpu.memory_space<smem>>
    memref.store %211, %arg5[%c9_59] : memref<10xf32, #tpu.memory_space<smem>>
    %c9_60 = arith.constant 9 : index
    %213 = memref.load %arg6[%c9_60] : memref<10xf32, #tpu.memory_space<smem>>
    %214 = arith.mulf %30, %205 : vector<16x128xf32>
    %215 = vector.shape_cast %214 : vector<16x128xf32> to vector<1x16x128xf32>
    %cst_61 = arith.constant dense<0.000000e+00> : vector<1xf32>
    %216 = vector.multi_reduction <add>, %215, %cst_61 [1, 2] : vector<1x16x128xf32> to vector<1xf32>
    %217 = vector.shape_cast %216 : vector<1xf32> to vector<1x1x1xf32>
    %218 = vector.extract %217[0, 0, 0] : f32 from vector<1x1x1xf32>
    %219 = arith.addf %213, %218 : f32
    %c9_62 = arith.constant 9 : index
    %220 = memref.load %arg6[%c9_62] : memref<10xf32, #tpu.memory_space<smem>>
    memref.store %219, %arg6[%c9_62] : memref<10xf32, #tpu.memory_space<smem>>
    %c0_i32_63 = arith.constant 0 : i32
    %221 = arith.cmpi eq, %arg0, %c0_i32_63 : i32
    %222 = arith.extui %221 : i1 to i32
    %c0_i32_64 = arith.constant 0 : i32
    %223 = arith.cmpi ne, %222, %c0_i32_64 : i32
    scf.if %223 {
      %c0_65 = arith.constant 0 : index
      %224 = memref.load %arg5[%c0_65] : memref<10xf32, #tpu.memory_space<smem>>
      %cst_66 = arith.constant 0.000000e+00 : f32
      %225 = arith.cmpf ogt, %224, %cst_66 : f32
      %c0_67 = arith.constant 0 : index
      %226 = memref.load %arg6[%c0_67] : memref<10xf32, #tpu.memory_space<smem>>
      %cst_68 = arith.constant 1.000000e+00 : f32
      %227 = arith.maximumf %224, %cst_68 : f32
      %228 = arith.divf %226, %227 : f32
      %cst_69 = arith.constant 0.000000e+00 : f32
      %229 = arith.select %225, %228, %cst_69 : f32
      %cst_70 = arith.constant 0.000000e+00 : f32
      %230 = arith.addf %cst_70, %229 : f32
      %231 = arith.extui %225 : i1 to i32
      %232 = arith.sitofp %231 : i32 to f32
      %cst_71 = arith.constant 0.000000e+00 : f32
      %233 = arith.addf %cst_71, %232 : f32
      %c1_72 = arith.constant 1 : index
      %234 = memref.load %arg5[%c1_72] : memref<10xf32, #tpu.memory_space<smem>>
      %cst_73 = arith.constant 0.000000e+00 : f32
      %235 = arith.cmpf ogt, %234, %cst_73 : f32
      %c1_74 = arith.constant 1 : index
      %236 = memref.load %arg6[%c1_74] : memref<10xf32, #tpu.memory_space<smem>>
      %cst_75 = arith.constant 1.000000e+00 : f32
      %237 = arith.maximumf %234, %cst_75 : f32
      %238 = arith.divf %236, %237 : f32
      %cst_76 = arith.constant 0.000000e+00 : f32
      %239 = arith.select %235, %238, %cst_76 : f32
      %240 = arith.addf %230, %239 : f32
      %241 = arith.extui %235 : i1 to i32
      %242 = arith.sitofp %241 : i32 to f32
      %243 = arith.addf %233, %242 : f32
      %c2_77 = arith.constant 2 : index
      %244 = memref.load %arg5[%c2_77] : memref<10xf32, #tpu.memory_space<smem>>
      %cst_78 = arith.constant 0.000000e+00 : f32
      %245 = arith.cmpf ogt, %244, %cst_78 : f32
      %c2_79 = arith.constant 2 : index
      %246 = memref.load %arg6[%c2_79] : memref<10xf32, #tpu.memory_space<smem>>
      %cst_80 = arith.constant 1.000000e+00 : f32
      %247 = arith.maximumf %244, %cst_80 : f32
      %248 = arith.divf %246, %247 : f32
      %cst_81 = arith.constant 0.000000e+00 : f32
      %249 = arith.select %245, %248, %cst_81 : f32
      %250 = arith.addf %240, %249 : f32
      %251 = arith.extui %245 : i1 to i32
      %252 = arith.sitofp %251 : i32 to f32
      %253 = arith.addf %243, %252 : f32
      %c3_82 = arith.constant 3 : index
      %254 = memref.load %arg5[%c3_82] : memref<10xf32, #tpu.memory_space<smem>>
      %cst_83 = arith.constant 0.000000e+00 : f32
      %255 = arith.cmpf ogt, %254, %cst_83 : f32
      %c3_84 = arith.constant 3 : index
      %256 = memref.load %arg6[%c3_84] : memref<10xf32, #tpu.memory_space<smem>>
      %cst_85 = arith.constant 1.000000e+00 : f32
      %257 = arith.maximumf %254, %cst_85 : f32
      %258 = arith.divf %256, %257 : f32
      %cst_86 = arith.constant 0.000000e+00 : f32
      %259 = arith.select %255, %258, %cst_86 : f32
      %260 = arith.addf %250, %259 : f32
      %261 = arith.extui %255 : i1 to i32
      %262 = arith.sitofp %261 : i32 to f32
      %263 = arith.addf %253, %262 : f32
      %c4_87 = arith.constant 4 : index
      %264 = memref.load %arg5[%c4_87] : memref<10xf32, #tpu.memory_space<smem>>
      %cst_88 = arith.constant 0.000000e+00 : f32
      %265 = arith.cmpf ogt, %264, %cst_88 : f32
      %c4_89 = arith.constant 4 : index
      %266 = memref.load %arg6[%c4_89] : memref<10xf32, #tpu.memory_space<smem>>
      %cst_90 = arith.constant 1.000000e+00 : f32
      %267 = arith.maximumf %264, %cst_90 : f32
      %268 = arith.divf %266, %267 : f32
      %cst_91 = arith.constant 0.000000e+00 : f32
      %269 = arith.select %265, %268, %cst_91 : f32
      %270 = arith.addf %260, %269 : f32
      %271 = arith.extui %265 : i1 to i32
      %272 = arith.sitofp %271 : i32 to f32
      %273 = arith.addf %263, %272 : f32
      %c5_92 = arith.constant 5 : index
      %274 = memref.load %arg5[%c5_92] : memref<10xf32, #tpu.memory_space<smem>>
      %cst_93 = arith.constant 0.000000e+00 : f32
      %275 = arith.cmpf ogt, %274, %cst_93 : f32
      %c5_94 = arith.constant 5 : index
      %276 = memref.load %arg6[%c5_94] : memref<10xf32, #tpu.memory_space<smem>>
      %cst_95 = arith.constant 1.000000e+00 : f32
      %277 = arith.maximumf %274, %cst_95 : f32
      %278 = arith.divf %276, %277 : f32
      %cst_96 = arith.constant 0.000000e+00 : f32
      %279 = arith.select %275, %278, %cst_96 : f32
      %280 = arith.addf %270, %279 : f32
      %281 = arith.extui %275 : i1 to i32
      %282 = arith.sitofp %281 : i32 to f32
      %283 = arith.addf %273, %282 : f32
      %c6_97 = arith.constant 6 : index
      %284 = memref.load %arg5[%c6_97] : memref<10xf32, #tpu.memory_space<smem>>
      %cst_98 = arith.constant 0.000000e+00 : f32
      %285 = arith.cmpf ogt, %284, %cst_98 : f32
      %c6_99 = arith.constant 6 : index
      %286 = memref.load %arg6[%c6_99] : memref<10xf32, #tpu.memory_space<smem>>
      %cst_100 = arith.constant 1.000000e+00 : f32
      %287 = arith.maximumf %284, %cst_100 : f32
      %288 = arith.divf %286, %287 : f32
      %cst_101 = arith.constant 0.000000e+00 : f32
      %289 = arith.select %285, %288, %cst_101 : f32
      %290 = arith.addf %280, %289 : f32
      %291 = arith.extui %285 : i1 to i32
      %292 = arith.sitofp %291 : i32 to f32
      %293 = arith.addf %283, %292 : f32
      %c7_102 = arith.constant 7 : index
      %294 = memref.load %arg5[%c7_102] : memref<10xf32, #tpu.memory_space<smem>>
      %cst_103 = arith.constant 0.000000e+00 : f32
      %295 = arith.cmpf ogt, %294, %cst_103 : f32
      %c7_104 = arith.constant 7 : index
      %296 = memref.load %arg6[%c7_104] : memref<10xf32, #tpu.memory_space<smem>>
      %cst_105 = arith.constant 1.000000e+00 : f32
      %297 = arith.maximumf %294, %cst_105 : f32
      %298 = arith.divf %296, %297 : f32
      %cst_106 = arith.constant 0.000000e+00 : f32
      %299 = arith.select %295, %298, %cst_106 : f32
      %300 = arith.addf %290, %299 : f32
      %301 = arith.extui %295 : i1 to i32
      %302 = arith.sitofp %301 : i32 to f32
      %303 = arith.addf %293, %302 : f32
      %c8_107 = arith.constant 8 : index
      %304 = memref.load %arg5[%c8_107] : memref<10xf32, #tpu.memory_space<smem>>
      %cst_108 = arith.constant 0.000000e+00 : f32
      %305 = arith.cmpf ogt, %304, %cst_108 : f32
      %c8_109 = arith.constant 8 : index
      %306 = memref.load %arg6[%c8_109] : memref<10xf32, #tpu.memory_space<smem>>
      %cst_110 = arith.constant 1.000000e+00 : f32
      %307 = arith.maximumf %304, %cst_110 : f32
      %308 = arith.divf %306, %307 : f32
      %cst_111 = arith.constant 0.000000e+00 : f32
      %309 = arith.select %305, %308, %cst_111 : f32
      %310 = arith.addf %300, %309 : f32
      %311 = arith.extui %305 : i1 to i32
      %312 = arith.sitofp %311 : i32 to f32
      %313 = arith.addf %303, %312 : f32
      %c9_112 = arith.constant 9 : index
      %314 = memref.load %arg5[%c9_112] : memref<10xf32, #tpu.memory_space<smem>>
      %cst_113 = arith.constant 0.000000e+00 : f32
      %315 = arith.cmpf ogt, %314, %cst_113 : f32
      %c9_114 = arith.constant 9 : index
      %316 = memref.load %arg6[%c9_114] : memref<10xf32, #tpu.memory_space<smem>>
      %cst_115 = arith.constant 1.000000e+00 : f32
      %317 = arith.maximumf %314, %cst_115 : f32
      %318 = arith.divf %316, %317 : f32
      %cst_116 = arith.constant 0.000000e+00 : f32
      %319 = arith.select %315, %318, %cst_116 : f32
      %320 = arith.addf %310, %319 : f32
      %321 = arith.extui %315 : i1 to i32
      %322 = arith.sitofp %321 : i32 to f32
      %323 = arith.addf %313, %322 : f32
      %cst_117 = arith.constant 1.000000e+00 : f32
      %324 = arith.maximumf %323, %cst_117 : f32
      %cst_118 = arith.constant 1.000000e+00 : f32
      %325 = arith.divf %cst_118, %324 : f32
      %326 = arith.mulf %320, %325 : f32
      %c0_119 = arith.constant 0 : index
      %c0_120 = arith.constant 0 : index
      %327 = memref.load %arg4[%c0_119, %c0_120] : memref<1x1xf32, #tpu.memory_space<smem>>
      memref.store %326, %arg4[%c0_119, %c0_120] : memref<1x1xf32, #tpu.memory_space<smem>>
    } else {
    }
    return
  }
  func.func @transform_0(%arg0: i32) -> (i32, i32) {
    %c0_i32 = arith.constant 0 : i32
    %c0_i32_0 = arith.constant 0 : i32
    return %arg0, %c0_i32 : i32, i32
  }
  func.func @transform_1(%arg0: i32) -> (i32, i32) {
    %c0_i32 = arith.constant 0 : i32
    %c0_i32_0 = arith.constant 0 : i32
    return %arg0, %c0_i32 : i32, i32
  }
  func.func @transform_2(%arg0: i32) -> (i32, i32) {
    %c0_i32 = arith.constant 0 : i32
    %c0_i32_0 = arith.constant 0 : i32
    return %arg0, %c0_i32 : i32, i32
  }
  func.func @transform_3(%arg0: i32) -> (i32, i32) {
    %c0_i32 = arith.constant 0 : i32
    %c0_i32_0 = arith.constant 0 : i32
    %c0_i32_1 = arith.constant 0 : i32
    return %c0_i32, %c0_i32_0 : i32, i32
  }
}

</mosaic_0001>

<llo_original>
// kernel: tpu_custom_call.1
$region0: #{tpu_custom_call.1}
  #allocation0 [shape = 'u32[]', space=smem, size = 0x4, offset = 0x4, fixed_abs, tag = 'smem constant byte address 0x4 - core index']
  #allocation1 [shape = 'u32[144,128]{1,0:T(1,128)}', space=vmem, size = 0x12000, scoped, tag = 'internal scratch']
  #allocation2 [shape = 'f32[10]{0:T(128)}', space=smem, size = 0x200, scoped, tag = 'scratch operand']
  #allocation3 [shape = 'f32[10]{0:T(128)}', space=smem, size = 0x200, scoped, tag = 'scratch operand']
  %s0 = inlined_call_operand.hbm [shape: f32[16,128], index: 0, kind: input, shape index: {}]
  %s1 = inlined_call_operand.hbm [shape: f32[16,128], index: 1, kind: input, shape index: {}]
  %s2 = inlined_call_operand.hbm [shape: f32[16,128], index: 2, kind: input, shape index: {}]
  %s3 = inlined_call_operand.hbm [shape: f32[1,1], index: 3, kind: output, shape index: {}]
  %s4 = sld [smem:[#allocation0]]
  $region42: #{tpu_custom_call.1} parent=0
    _
  %s6 = ssub.s32 1, %s4
  %s7 = scalar_select 0, %s6, %s4
  $region1: #{tpu_custom_call.1} parent=0
    #allocation4 [shape = 'u8[8192]{0}', space=vmem, size = 0x2000, scoped, tag = 'input window, operand 0, single buffered']
    #allocation5 [shape = 's32[1]{0}', space=sflag, size = 0x4, scoped, tag = 'scoped memory for tpu_custom_call.1']
    #allocation6 [shape = 's32[1]{0}', space=sflag, size = 0x4, scoped, tag = 'scoped memory for tpu_custom_call.1']
    #allocation7 [shape = 'u8[8192]{0}', space=vmem, size = 0x2000, scoped, tag = 'input window, operand 1, single buffered']
    #allocation8 [shape = 's32[1]{0}', space=sflag, size = 0x4, scoped, tag = 'scoped memory for tpu_custom_call.1']
    #allocation9 [shape = 'u8[8192]{0}', space=vmem, size = 0x2000, scoped, tag = 'input window, operand 2, single buffered']
    #allocation10 [shape = 'u8[512]{0}', space=smem, size = 0x200, scoped, tag = 'output window, operand 0, single buffered']
    %8 = vsyncpa [#allocation5], 0
    %9 = vsyncpa [#allocation8], 0
    %10 = vsyncpa [#allocation6], 0
    // Predicated region
    $region2: #{tpu_custom_call.1} parent=1 // pred_check
      _
    $region3: #{tpu_custom_call.1} parent=1 // pred_check_branch
      %12 = sbr.rel (0) target = $region5
    $region4: #{tpu_custom_call.1} parent=1 // pred_region
      %s14 = ssub.s32 256, 256
      %15 = vsyncadd [#allocation5], %s14
      %s16 = sshll.u32 [#allocation4], 4
      %s17 = int_to_ptr.vmem [resolvable:$true] %s16
      %22 = dma.hbm_to_vmem [thread:$0]  %s0, 256, %s17, [#allocation5], 128, 128, 8
    $region5: #{tpu_custom_call.1} parent=1 // pred_fallthru
      _
    // Predicated region
    $region6: #{tpu_custom_call.1} parent=1 // pred_check
      _
    $region7: #{tpu_custom_call.1} parent=1 // pred_check_branch
      %24 = sbr.rel (0) target = $region9
    $region8: #{tpu_custom_call.1} parent=1 // pred_region
      %s26 = ssub.s32 256, 256
      %27 = vsyncadd [#allocation8], %s26
      %s28 = sshll.u32 [#allocation7], 4
      %s29 = int_to_ptr.vmem [resolvable:$true] %s28
      %34 = dma.hbm_to_vmem [thread:$0]  %s1, 256, %s29, [#allocation8], 128, 128, 8
    $region9: #{tpu_custom_call.1} parent=1 // pred_fallthru
      _
    // Predicated region
    $region10: #{tpu_custom_call.1} parent=1 // pred_check
      _
    $region11: #{tpu_custom_call.1} parent=1 // pred_check_branch
      %36 = sbr.rel (0) target = $region13
    $region12: #{tpu_custom_call.1} parent=1 // pred_region
      %s38 = ssub.s32 256, 256
      %39 = vsyncadd [#allocation8], %s38
      %s40 = sshll.u32 [#allocation9], 4
      %s41 = int_to_ptr.vmem [resolvable:$true] %s40
      %46 = dma.hbm_to_vmem [thread:$0]  %s2, 256, %s41, [#allocation8], 128, 128, 8
    $region13: #{tpu_custom_call.1} parent=1 // pred_fallthru
      _
    // Predicated region
    $region14: #{tpu_custom_call.1} parent=1 // pred_check
      _
    $region15: #{tpu_custom_call.1} parent=1 // pred_check_branch
      %48 = sbr.rel (0) target = $region17
    $region16: #{tpu_custom_call.1} parent=1 // pred_region
      %49 = dma.done [#allocation5], 256
    $region17: #{tpu_custom_call.1} parent=1 // pred_fallthru
      _
    // Predicated region
    $region18: #{tpu_custom_call.1} parent=1 // pred_check
      _
    $region19: #{tpu_custom_call.1} parent=1 // pred_check_branch
      %51 = sbr.rel (0) target = $region21
    $region20: #{tpu_custom_call.1} parent=1 // pred_region
      %52 = dma.done [#allocation8], 256
    $region21: #{tpu_custom_call.1} parent=1 // pred_fallthru
      _
    // Predicated region
    $region22: #{tpu_custom_call.1} parent=1 // pred_check
      _
    $region23: #{tpu_custom_call.1} parent=1 // pred_check_branch
      %54 = sbr.rel (0) target = $region25
    $region24: #{tpu_custom_call.1} parent=1 // pred_region
      %55 = dma.done [#allocation8], 256
    $region25: #{tpu_custom_call.1} parent=1 // pred_fallthru
      _
    %p56 = scmp.eq.s32.totalorder 0, 0
    // Predicated region
    $region26: #{tpu_custom_call.1} parent=1 // pred_check
      %p57 = pneg %p56
    $region27: #{tpu_custom_call.1} parent=1 // pred_check_branch
      %59 = sbr.rel (%p57) target = $region29
    $region28: #{tpu_custom_call.1} parent=1 // pred_region
      %s60 = scalar_lea.smem [#allocation2], 0
      %61 = sst [smem:[%s60]] 0.0
      %s62 = scalar_lea.smem [#allocation3], 0
      %63 = sst [smem:[%s62]] 0.0
      %s64 = scalar_lea.smem [#allocation2], 1
      %65 = sst [smem:[%s64]] 0.0
      %s66 = scalar_lea.smem [#allocation3], 1
      %67 = sst [smem:[%s66]] 0.0
      %s68 = scalar_lea.smem [#allocation2], 2
      %69 = sst [smem:[%s68]] 0.0
      %s70 = scalar_lea.smem [#allocation3], 2
      %71 = sst [smem:[%s70]] 0.0
      %s72 = scalar_lea.smem [#allocation2], 3
      %73 = sst [smem:[%s72]] 0.0
      %s74 = scalar_lea.smem [#allocation3], 3
      %75 = sst [smem:[%s74]] 0.0
      %s76 = scalar_lea.smem [#allocation2], 4
      %77 = sst [smem:[%s76]] 0.0
      %s78 = scalar_lea.smem [#allocation3], 4
      %79 = sst [smem:[%s78]] 0.0
      %s80 = scalar_lea.smem [#allocation2], 5
      %81 = sst [smem:[%s80]] 0.0
      %s82 = scalar_lea.smem [#allocation3], 5
      %83 = sst [smem:[%s82]] 0.0
      %s84 = scalar_lea.smem [#allocation2], 6
      %85 = sst [smem:[%s84]] 0.0
      %s86 = scalar_lea.smem [#allocation3], 6
      %87 = sst [smem:[%s86]] 0.0
      %s88 = scalar_lea.smem [#allocation2], 7
      %89 = sst [smem:[%s88]] 0.0
      %s90 = scalar_lea.smem [#allocation3], 7
      %91 = sst [smem:[%s90]] 0.0
      %s92 = scalar_lea.smem [#allocation2], 8
      %93 = sst [smem:[%s92]] 0.0
      %s94 = scalar_lea.smem [#allocation3], 8
      %95 = sst [smem:[%s94]] 0.0
      %s96 = scalar_lea.smem [#allocation2], 9
      %97 = sst [smem:[%s96]] 0.0
      %s98 = scalar_lea.smem [#allocation3], 9
      %99 = sst [smem:[%s98]] 0.0
    $region29: #{tpu_custom_call.1} parent=1 // pred_fallthru
      _
    %v100 = vld [vmem:[#allocation4] sm:$0xff]
    %v101 = vld [vmem:[#allocation4 + $0x8] sm:$0xff]
    %v102 = vld [vmem:[#allocation7] sm:$0xff]
    %v103 = vld [vmem:[#allocation7 + $0x8] sm:$0xff]
    %v104 = vsub.f32 %v100, %v102
    %v105 = vsub.f32 %v101, %v103
    %v106 = vand.u32 2147483647, %v104
    %v107 = vand.u32 2147483647, %v105
    %v108 = vmul.f32 %v106, 10.0
    %v109 = vmul.f32 %v107, 10.0
    %v110 = vfloor.f32 %v108
    %v111 = vfloor.f32 %v109
    %v112 = vcvt.f32.s32.to.zero.pseudo %v110
    %v113 = vcvt.f32.s32.to.zero.pseudo %v111
    %vm114 = vcmp.lt.s32.totalorder %v112, 9
    %v115 = vsel %vm114, %v112, 9
    %vm116 = vcmp.lt.s32.totalorder %v113, 9
    %v117 = vsel %vm116, %v113, 9
    %vm118 = vcmp.lt.f32.partialorder %v106, 1.000001
    %vm119 = vcmp.lt.f32.partialorder %v107, 1.000001
    %v120 = vld [vmem:[#allocation9] sm:$0xff]
    %v121 = vld [vmem:[#allocation9 + $0x8] sm:$0xff]
    %vm122 = vcmp.gt.f32.partialorder %v120, 0.0
    %vm123 = vcmp.gt.f32.partialorder %v121, 0.0
    %vm124 = vmand %vm118, %vm122
    %vm125 = vmand %vm119, %vm123
    %v126 = vsel %vm124, %v115, 4294967295
    %v127 = vsel %vm125, %v117, 4294967295
    %v128 = vmax.f32 %v100, 0.0
    %v129 = vmax.f32 %v101, 0.0
    %v130 = vmul.f32 %v100, %v102
    %v131 = vmul.f32 %v101, %v103
    %v132 = vsub.f32 %v128, %v130
    %v133 = vsub.f32 %v129, %v131
    %v134 = vand.u32 2147483647, %v100
    %v135 = vand.u32 2147483647, %v101
    %v136 = vsub.f32 0.0, %v134
    %v137 = vsub.f32 0.0, %v135
    %v138 = vmul.f32 %v136, 1.442695
    %v139 = vpow.pop %v138
    %v140 = vmul.f32 %v137, 1.442695
    %v141 = vpow.pop %v140
    %v142 = vadd.f32 %v139, 1.0
    %v143 = vlog2.pop %v142
    %v144 = vmul.f32 %v143, 0.6931472
    %v145 = vmul.f32 -0.5, %v139
    %v146 = vadd.f32 %v145, 1.0
    %v147 = vmul.f32 %v146, %v139
    %v148 = vand.u32 2147483647, %v139
    %vm149 = vcmp.lt.f32.partialorder %v148, 0.0004427343
    %v150 = vsel %vm149, %v147, %v144
    %v151 = vadd.f32 %v141, 1.0
    %v152 = vlog2.pop %v151
    %v153 = vmul.f32 %v152, 0.6931472
    %v154 = vmul.f32 -0.5, %v141
    %v155 = vadd.f32 %v154, 1.0
    %v156 = vmul.f32 %v155, %v141
    %v157 = vand.u32 2147483647, %v141
    %vm158 = vcmp.lt.f32.partialorder %v157, 0.0004427343
    %v159 = vsel %vm158, %v156, %v153
    %v160 = vadd.f32 %v132, %v150
    %v161 = vadd.f32 %v133, %v159
    %vm162 = vcmp.eq.s32.totalorder %v126, 0
    %vm163 = vcmp.eq.s32.totalorder %v127, 0
    %v164 = vsel %vm162, 1, 0
    %v165 = vsel %vm163, 1, 0
    %v166 = vcvt.s32.f32 %v164
    %v167 = vcvt.s32.f32 %v165
    %s168 = sld [smem:[#allocation2]]
    %v169 = vadd.f32 %v166, %v167
    %170 = vadd.xlane.f32.xlu0 %v169
    %v171 = vpop.xlane.xlu0 %170
    %v172 = vrot.slane %v171, 4
    %v173 = vadd.f32 %v171, %v172
    %v174 = vrot.slane %v173, 2
    %v175 = vadd.f32 %v173, %v174
    %v176 = vrot.slane %v175, 1
    %v177 = vadd.f32 %v175, %v176
    %s178 = vtos %v177
    %s179 = sadd.f32 %s168, %s178
    %s180 = scalar_lea.smem [#allocation2], 0
    %181 = sst [smem:[%s180]] %s179
    %s182 = sld [smem:[#allocation3]]
    %v183 = vmul.f32 %v160, %v166
    %v184 = vmul.f32 %v161, %v167
    %v185 = vadd.f32 %v183, %v184
    %186 = vadd.xlane.f32.xlu0 %v185
    %v187 = vpop.xlane.xlu0 %186
    %v188 = vrot.slane %v187, 4
    %v189 = vadd.f32 %v187, %v188
    %v190 = vrot.slane %v189, 2
    %v191 = vadd.f32 %v189, %v190
    %v192 = vrot.slane %v191, 1
    %v193 = vadd.f32 %v191, %v192
    %s194 = vtos %v193
    %s195 = sadd.f32 %s182, %s194
    %s196 = scalar_lea.smem [#allocation3], 0
    %197 = sst [smem:[%s196]] %s195
    %vm198 = vcmp.eq.s32.totalorder %v126, 1
    %vm199 = vcmp.eq.s32.totalorder %v127, 1
    %v200 = vsel %vm198, 1, 0
    %v201 = vsel %vm199, 1, 0
    %v202 = vcvt.s32.f32 %v200
    %v203 = vcvt.s32.f32 %v201
    %s204 = sld [smem:[#allocation2 + $0x1]]
    %v205 = vadd.f32 %v202, %v203
    %206 = vadd.xlane.f32.xlu0 %v205
    %v207 = vpop.xlane.xlu0 %206
    %v208 = vrot.slane %v207, 4
    %v209 = vadd.f32 %v207, %v208
    %v210 = vrot.slane %v209, 2
    %v211 = vadd.f32 %v209, %v210
    %v212 = vrot.slane %v211, 1
    %v213 = vadd.f32 %v211, %v212
    %s214 = vtos %v213
    %s215 = sadd.f32 %s204, %s214
    %s216 = scalar_lea.smem [#allocation2], 1
    %217 = sst [smem:[%s216]] %s215
    %s218 = sld [smem:[#allocation3 + $0x1]]
    %v219 = vmul.f32 %v160, %v202
    %v220 = vmul.f32 %v161, %v203
    %v221 = vadd.f32 %v219, %v220
    %222 = vadd.xlane.f32.xlu0 %v221
    %v223 = vpop.xlane.xlu0 %222
    %v224 = vrot.slane %v223, 4
    %v225 = vadd.f32 %v223, %v224
    %v226 = vrot.slane %v225, 2
    %v227 = vadd.f32 %v225, %v226
    %v228 = vrot.slane %v227, 1
    %v229 = vadd.f32 %v227, %v228
    %s230 = vtos %v229
    %s231 = sadd.f32 %s218, %s230
    %s232 = scalar_lea.smem [#allocation3], 1
    %233 = sst [smem:[%s232]] %s231
    %vm234 = vcmp.eq.s32.totalorder %v126, 2
    %vm235 = vcmp.eq.s32.totalorder %v127, 2
    %v236 = vsel %vm234, 1, 0
    %v237 = vsel %vm235, 1, 0
    %v238 = vcvt.s32.f32 %v236
    %v239 = vcvt.s32.f32 %v237
    %s240 = sld [smem:[#allocation2 + $0x2]]
    %v241 = vadd.f32 %v238, %v239
    %242 = vadd.xlane.f32.xlu0 %v241
    %v243 = vpop.xlane.xlu0 %242
    %v244 = vrot.slane %v243, 4
    %v245 = vadd.f32 %v243, %v244
    %v246 = vrot.slane %v245, 2
    %v247 = vadd.f32 %v245, %v246
    %v248 = vrot.slane %v247, 1
    %v249 = vadd.f32 %v247, %v248
    %s250 = vtos %v249
    %s251 = sadd.f32 %s240, %s250
    %s252 = scalar_lea.smem [#allocation2], 2
    %253 = sst [smem:[%s252]] %s251
    %s254 = sld [smem:[#allocation3 + $0x2]]
    %v255 = vmul.f32 %v160, %v238
    %v256 = vmul.f32 %v161, %v239
    %v257 = vadd.f32 %v255, %v256
    %258 = vadd.xlane.f32.xlu0 %v257
    %v259 = vpop.xlane.xlu0 %258
    %v260 = vrot.slane %v259, 4
    %v261 = vadd.f32 %v259, %v260
    %v262 = vrot.slane %v261, 2
    %v263 = vadd.f32 %v261, %v262
    %v264 = vrot.slane %v263, 1
    %v265 = vadd.f32 %v263, %v264
    %s266 = vtos %v265
    %s267 = sadd.f32 %s254, %s266
    %s268 = scalar_lea.smem [#allocation3], 2
    %269 = sst [smem:[%s268]] %s267
    %vm270 = vcmp.eq.s32.totalorder %v126, 3
    %vm271 = vcmp.eq.s32.totalorder %v127, 3
    %v272 = vsel %vm270, 1, 0
    %v273 = vsel %vm271, 1, 0
    %v274 = vcvt.s32.f32 %v272
    %v275 = vcvt.s32.f32 %v273
    %s276 = sld [smem:[#allocation2 + $0x3]]
    %v277 = vadd.f32 %v274, %v275
    %278 = vadd.xlane.f32.xlu0 %v277
    %v279 = vpop.xlane.xlu0 %278
    %v280 = vrot.slane %v279, 4
    %v281 = vadd.f32 %v279, %v280
    %v282 = vrot.slane %v281, 2
    %v283 = vadd.f32 %v281, %v282
    %v284 = vrot.slane %v283, 1
    %v285 = vadd.f32 %v283, %v284
    %s286 = vtos %v285
    %s287 = sadd.f32 %s276, %s286
    %s288 = scalar_lea.smem [#allocation2], 3
    %289 = sst [smem:[%s288]] %s287
    %s290 = sld [smem:[#allocation3 + $0x3]]
    %v291 = vmul.f32 %v160, %v274
    %v292 = vmul.f32 %v161, %v275
    %v293 = vadd.f32 %v291, %v292
    %294 = vadd.xlane.f32.xlu0 %v293
    %v295 = vpop.xlane.xlu0 %294
    %v296 = vrot.slane %v295, 4
    %v297 = vadd.f32 %v295, %v296
    %v298 = vrot.slane %v297, 2
    %v299 = vadd.f32 %v297, %v298
    %v300 = vrot.slane %v299, 1
    %v301 = vadd.f32 %v299, %v300
    %s302 = vtos %v301
    %s303 = sadd.f32 %s290, %s302
    %s304 = scalar_lea.smem [#allocation3], 3
    %305 = sst [smem:[%s304]] %s303
    %vm306 = vcmp.eq.s32.totalorder %v126, 4
    %vm307 = vcmp.eq.s32.totalorder %v127, 4
    %v308 = vsel %vm306, 1, 0
    %v309 = vsel %vm307, 1, 0
    %v310 = vcvt.s32.f32 %v308
    %v311 = vcvt.s32.f32 %v309
    %s312 = sld [smem:[#allocation2 + $0x4]]
    %v313 = vadd.f32 %v310, %v311
    %314 = vadd.xlane.f32.xlu0 %v313
    %v315 = vpop.xlane.xlu0 %314
    %v316 = vrot.slane %v315, 4
    %v317 = vadd.f32 %v315, %v316
    %v318 = vrot.slane %v317, 2
    %v319 = vadd.f32 %v317, %v318
    %v320 = vrot.slane %v319, 1
    %v321 = vadd.f32 %v319, %v320
    %s322 = vtos %v321
    %s323 = sadd.f32 %s312, %s322
    %s324 = scalar_lea.smem [#allocation2], 4
    %325 = sst [smem:[%s324]] %s323
    %s326 = sld [smem:[#allocation3 + $0x4]]
    %v327 = vmul.f32 %v160, %v310
    %v328 = vmul.f32 %v161, %v311
    %v329 = vadd.f32 %v327, %v328
    %330 = vadd.xlane.f32.xlu0 %v329
    %v331 = vpop.xlane.xlu0 %330
    %v332 = vrot.slane %v331, 4
    %v333 = vadd.f32 %v331, %v332
    %v334 = vrot.slane %v333, 2
    %v335 = vadd.f32 %v333, %v334
    %v336 = vrot.slane %v335, 1
    %v337 = vadd.f32 %v335, %v336
    %s338 = vtos %v337
    %s339 = sadd.f32 %s326, %s338
    %s340 = scalar_lea.smem [#allocation3], 4
    %341 = sst [smem:[%s340]] %s339
    %vm342 = vcmp.eq.s32.totalorder %v126, 5
    %vm343 = vcmp.eq.s32.totalorder %v127, 5
    %v344 = vsel %vm342, 1, 0
    %v345 = vsel %vm343, 1, 0
    %v346 = vcvt.s32.f32 %v344
    %v347 = vcvt.s32.f32 %v345
    %s348 = sld [smem:[#allocation2 + $0x5]]
    %v349 = vadd.f32 %v346, %v347
    %350 = vadd.xlane.f32.xlu0 %v349
    %v351 = vpop.xlane.xlu0 %350
    %v352 = vrot.slane %v351, 4
    %v353 = vadd.f32 %v351, %v352
    %v354 = vrot.slane %v353, 2
    %v355 = vadd.f32 %v353, %v354
    %v356 = vrot.slane %v355, 1
    %v357 = vadd.f32 %v355, %v356
    %s358 = vtos %v357
    %s359 = sadd.f32 %s348, %s358
    %s360 = scalar_lea.smem [#allocation2], 5
    %361 = sst [smem:[%s360]] %s359
    %s362 = sld [smem:[#allocation3 + $0x5]]
    %v363 = vmul.f32 %v160, %v346
    %v364 = vmul.f32 %v161, %v347
    %v365 = vadd.f32 %v363, %v364
    %366 = vadd.xlane.f32.xlu0 %v365
    %v367 = vpop.xlane.xlu0 %366
    %v368 = vrot.slane %v367, 4
    %v369 = vadd.f32 %v367, %v368
    %v370 = vrot.slane %v369, 2
    %v371 = vadd.f32 %v369, %v370
    %v372 = vrot.slane %v371, 1
    %v373 = vadd.f32 %v371, %v372
    %s374 = vtos %v373
    %s375 = sadd.f32 %s362, %s374
    %s376 = scalar_lea.smem [#allocation3], 5
    %377 = sst [smem:[%s376]] %s375
    %vm378 = vcmp.eq.s32.totalorder %v126, 6
    %vm379 = vcmp.eq.s32.totalorder %v127, 6
    %v380 = vsel %vm378, 1, 0
    %v381 = vsel %vm379, 1, 0
    %v382 = vcvt.s32.f32 %v380
    %v383 = vcvt.s32.f32 %v381
    %s384 = sld [smem:[#allocation2 + $0x6]]
    %v385 = vadd.f32 %v382, %v383
    %386 = vadd.xlane.f32.xlu0 %v385
    %v387 = vpop.xlane.xlu0 %386
    %v388 = vrot.slane %v387, 4
    %v389 = vadd.f32 %v387, %v388
    %v390 = vrot.slane %v389, 2
    %v391 = vadd.f32 %v389, %v390
    %v392 = vrot.slane %v391, 1
    %v393 = vadd.f32 %v391, %v392
    %s394 = vtos %v393
    %s395 = sadd.f32 %s384, %s394
    %s396 = scalar_lea.smem [#allocation2], 6
    %397 = sst [smem:[%s396]] %s395
    %s398 = sld [smem:[#allocation3 + $0x6]]
    %v399 = vmul.f32 %v160, %v382
    %v400 = vmul.f32 %v161, %v383
    %v401 = vadd.f32 %v399, %v400
    %402 = vadd.xlane.f32.xlu0 %v401
    %v403 = vpop.xlane.xlu0 %402
    %v404 = vrot.slane %v403, 4
    %v405 = vadd.f32 %v403, %v404
    %v406 = vrot.slane %v405, 2
    %v407 = vadd.f32 %v405, %v406
    %v408 = vrot.slane %v407, 1
    %v409 = vadd.f32 %v407, %v408
    %s410 = vtos %v409
    %s411 = sadd.f32 %s398, %s410
    %s412 = scalar_lea.smem [#allocation3], 6
    %413 = sst [smem:[%s412]] %s411
    %vm414 = vcmp.eq.s32.totalorder %v126, 7
    %vm415 = vcmp.eq.s32.totalorder %v127, 7
    %v416 = vsel %vm414, 1, 0
    %v417 = vsel %vm415, 1, 0
    %v418 = vcvt.s32.f32 %v416
    %v419 = vcvt.s32.f32 %v417
    %s420 = sld [smem:[#allocation2 + $0x7]]
    %v421 = vadd.f32 %v418, %v419
    %422 = vadd.xlane.f32.xlu0 %v421
    %v423 = vpop.xlane.xlu0 %422
    %v424 = vrot.slane %v423, 4
    %v425 = vadd.f32 %v423, %v424
    %v426 = vrot.slane %v425, 2
    %v427 = vadd.f32 %v425, %v426
    %v428 = vrot.slane %v427, 1
    %v429 = vadd.f32 %v427, %v428
    %s430 = vtos %v429
    %s431 = sadd.f32 %s420, %s430
    %s432 = scalar_lea.smem [#allocation2], 7
    %433 = sst [smem:[%s432]] %s431
    %s434 = sld [smem:[#allocation3 + $0x7]]
    %v435 = vmul.f32 %v160, %v418
    %v436 = vmul.f32 %v161, %v419
    %v437 = vadd.f32 %v435, %v436
    %438 = vadd.xlane.f32.xlu0 %v437
    %v439 = vpop.xlane.xlu0 %438
    %v440 = vrot.slane %v439, 4
    %v441 = vadd.f32 %v439, %v440
    %v442 = vrot.slane %v441, 2
    %v443 = vadd.f32 %v441, %v442
    %v444 = vrot.slane %v443, 1
    %v445 = vadd.f32 %v443, %v444
    %s446 = vtos %v445
    %s447 = sadd.f32 %s434, %s446
    %s448 = scalar_lea.smem [#allocation3], 7
    %449 = sst [smem:[%s448]] %s447
    %vm450 = vcmp.eq.s32.totalorder %v126, 8
    %vm451 = vcmp.eq.s32.totalorder %v127, 8
    %v452 = vsel %vm450, 1, 0
    %v453 = vsel %vm451, 1, 0
    %v454 = vcvt.s32.f32 %v452
    %v455 = vcvt.s32.f32 %v453
    %s456 = sld [smem:[#allocation2 + $0x8]]
    %v457 = vadd.f32 %v454, %v455
    %458 = vadd.xlane.f32.xlu0 %v457
    %v459 = vpop.xlane.xlu0 %458
    %v460 = vrot.slane %v459, 4
    %v461 = vadd.f32 %v459, %v460
    %v462 = vrot.slane %v461, 2
    %v463 = vadd.f32 %v461, %v462
    %v464 = vrot.slane %v463, 1
    %v465 = vadd.f32 %v463, %v464
    %s466 = vtos %v465
    %s467 = sadd.f32 %s456, %s466
    %s468 = scalar_lea.smem [#allocation2], 8
    %469 = sst [smem:[%s468]] %s467
    %s470 = sld [smem:[#allocation3 + $0x8]]
    %v471 = vmul.f32 %v160, %v454
    %v472 = vmul.f32 %v161, %v455
    %v473 = vadd.f32 %v471, %v472
    %474 = vadd.xlane.f32.xlu0 %v473
    %v475 = vpop.xlane.xlu0 %474
    %v476 = vrot.slane %v475, 4
    %v477 = vadd.f32 %v475, %v476
    %v478 = vrot.slane %v477, 2
    %v479 = vadd.f32 %v477, %v478
    %v480 = vrot.slane %v479, 1
    %v481 = vadd.f32 %v479, %v480
    %s482 = vtos %v481
    %s483 = sadd.f32 %s470, %s482
    %s484 = scalar_lea.smem [#allocation3], 8
    %485 = sst [smem:[%s484]] %s483
    %vm486 = vcmp.eq.s32.totalorder %v126, 9
    %vm487 = vcmp.eq.s32.totalorder %v127, 9
    %v488 = vsel %vm486, 1, 0
    %v489 = vsel %vm487, 1, 0
    %v490 = vcvt.s32.f32 %v488
    %v491 = vcvt.s32.f32 %v489
    %s492 = sld [smem:[#allocation2 + $0x9]]
    %v493 = vadd.f32 %v490, %v491
    %494 = vadd.xlane.f32.xlu0 %v493
    %v495 = vpop.xlane.xlu0 %494
    %v496 = vrot.slane %v495, 4
    %v497 = vadd.f32 %v495, %v496
    %v498 = vrot.slane %v497, 2
    %v499 = vadd.f32 %v497, %v498
    %v500 = vrot.slane %v499, 1
    %v501 = vadd.f32 %v499, %v500
    %s502 = vtos %v501
    %s503 = sadd.f32 %s492, %s502
    %s504 = scalar_lea.smem [#allocation2], 9
    %505 = sst [smem:[%s504]] %s503
    %s506 = sld [smem:[#allocation3 + $0x9]]
    %v507 = vmul.f32 %v160, %v490
    %v508 = vmul.f32 %v161, %v491
    %v509 = vadd.f32 %v507, %v508
    %510 = vadd.xlane.f32.xlu0 %v509
    %v511 = vpop.xlane.xlu0 %510
    %v512 = vrot.slane %v511, 4
    %v513 = vadd.f32 %v511, %v512
    %v514 = vrot.slane %v513, 2
    %v515 = vadd.f32 %v513, %v514
    %v516 = vrot.slane %v515, 1
    %v517 = vadd.f32 %v515, %v516
    %s518 = vtos %v517
    %s519 = sadd.f32 %s506, %s518
    %s520 = scalar_lea.smem [#allocation3], 9
    %521 = sst [smem:[%s520]] %s519
    // Predicated region
    $region30: #{tpu_custom_call.1} parent=1 // pred_check
      %p522 = pneg %p56
    $region31: #{tpu_custom_call.1} parent=1 // pred_check_branch
      %524 = sbr.rel (%p522) target = $region33
    $region32: #{tpu_custom_call.1} parent=1 // pred_region
      %s525 = sld [smem:[#allocation2]]
      %p526 = scmp.gt.f32.partialorder %s525, 0.0
      %s527 = sld [smem:[#allocation3]]
      %s528 = smax.f32 %s525, 1.0
      %v529 = vstv %s528
      %v530 = vrcp.pop %v529
      %s531 = vtos %v530
      %s532 = smul.f32 %s527, %s531
      %s533 = scalar_select %p526, %s532, 0.0
      %s534 = sadd.f32 %s533, 0.0
      %s535 = scalar_select %p526, 1, 0
      %s536 = scvt.s32.f32 %s535
      %s537 = sadd.f32 %s536, 0.0
      %s538 = sld [smem:[#allocation2 + $0x1]]
      %p539 = scmp.gt.f32.partialorder %s538, 0.0
      %s540 = sld [smem:[#allocation3 + $0x1]]
      %s541 = smax.f32 %s538, 1.0
      %v542 = vstv %s541
      %v543 = vrcp.pop %v542
      %s544 = vtos %v543
      %s545 = smul.f32 %s540, %s544
      %s546 = scalar_select %p539, %s545, 0.0
      %s547 = sadd.f32 %s534, %s546
      %s548 = scalar_select %p539, 1, 0
      %s549 = scvt.s32.f32 %s548
      %s550 = sadd.f32 %s537, %s549
      %s551 = sld [smem:[#allocation2 + $0x2]]
      %p552 = scmp.gt.f32.partialorder %s551, 0.0
      %s553 = sld [smem:[#allocation3 + $0x2]]
      %s554 = smax.f32 %s551, 1.0
      %v555 = vstv %s554
      %v556 = vrcp.pop %v555
      %s557 = vtos %v556
      %s558 = smul.f32 %s553, %s557
      %s559 = scalar_select %p552, %s558, 0.0
      %s560 = sadd.f32 %s547, %s559
      %s561 = scalar_select %p552, 1, 0
      %s562 = scvt.s32.f32 %s561
      %s563 = sadd.f32 %s550, %s562
      %s564 = sld [smem:[#allocation2 + $0x3]]
      %p565 = scmp.gt.f32.partialorder %s564, 0.0
      %s566 = sld [smem:[#allocation3 + $0x3]]
      %s567 = smax.f32 %s564, 1.0
      %v568 = vstv %s567
      %v569 = vrcp.pop %v568
      %s570 = vtos %v569
      %s571 = smul.f32 %s566, %s570
      %s572 = scalar_select %p565, %s571, 0.0
      %s573 = sadd.f32 %s560, %s572
      %s574 = scalar_select %p565, 1, 0
      %s575 = scvt.s32.f32 %s574
      %s576 = sadd.f32 %s563, %s575
      %s577 = sld [smem:[#allocation2 + $0x4]]
      %p578 = scmp.gt.f32.partialorder %s577, 0.0
      %s579 = sld [smem:[#allocation3 + $0x4]]
      %s580 = smax.f32 %s577, 1.0
      %v581 = vstv %s580
      %v582 = vrcp.pop %v581
      %s583 = vtos %v582
      %s584 = smul.f32 %s579, %s583
      %s585 = scalar_select %p578, %s584, 0.0
      %s586 = sadd.f32 %s573, %s585
      %s587 = scalar_select %p578, 1, 0
      %s588 = scvt.s32.f32 %s587
      %s589 = sadd.f32 %s576, %s588
      %s590 = sld [smem:[#allocation2 + $0x5]]
      %p591 = scmp.gt.f32.partialorder %s590, 0.0
      %s592 = sld [smem:[#allocation3 + $0x5]]
      %s593 = smax.f32 %s590, 1.0
      %v594 = vstv %s593
      %v595 = vrcp.pop %v594
      %s596 = vtos %v595
      %s597 = smul.f32 %s592, %s596
      %s598 = scalar_select %p591, %s597, 0.0
      %s599 = sadd.f32 %s586, %s598
      %s600 = scalar_select %p591, 1, 0
      %s601 = scvt.s32.f32 %s600
      %s602 = sadd.f32 %s589, %s601
      %s603 = sld [smem:[#allocation2 + $0x6]]
      %p604 = scmp.gt.f32.partialorder %s603, 0.0
      %s605 = sld [smem:[#allocation3 + $0x6]]
      %s606 = smax.f32 %s603, 1.0
      %v607 = vstv %s606
      %v608 = vrcp.pop %v607
      %s609 = vtos %v608
      %s610 = smul.f32 %s605, %s609
      %s611 = scalar_select %p604, %s610, 0.0
      %s612 = sadd.f32 %s599, %s611
      %s613 = scalar_select %p604, 1, 0
      %s614 = scvt.s32.f32 %s613
      %s615 = sadd.f32 %s602, %s614
      %s616 = sld [smem:[#allocation2 + $0x7]]
      %p617 = scmp.gt.f32.partialorder %s616, 0.0
      %s618 = sld [smem:[#allocation3 + $0x7]]
      %s619 = smax.f32 %s616, 1.0
      %v620 = vstv %s619
      %v621 = vrcp.pop %v620
      %s622 = vtos %v621
      %s623 = smul.f32 %s618, %s622
      %s624 = scalar_select %p617, %s623, 0.0
      %s625 = sadd.f32 %s612, %s624
      %s626 = scalar_select %p617, 1, 0
      %s627 = scvt.s32.f32 %s626
      %s628 = sadd.f32 %s615, %s627
      %s629 = sld [smem:[#allocation2 + $0x8]]
      %p630 = scmp.gt.f32.partialorder %s629, 0.0
      %s631 = sld [smem:[#allocation3 + $0x8]]
      %s632 = smax.f32 %s629, 1.0
      %v633 = vstv %s632
      %v634 = vrcp.pop %v633
      %s635 = vtos %v634
      %s636 = smul.f32 %s631, %s635
      %s637 = scalar_select %p630, %s636, 0.0
      %s638 = sadd.f32 %s625, %s637
      %s639 = scalar_select %p630, 1, 0
      %s640 = scvt.s32.f32 %s639
      %s641 = sadd.f32 %s628, %s640
      %s642 = sld [smem:[#allocation2 + $0x9]]
      %p643 = scmp.gt.f32.partialorder %s642, 0.0
      %s644 = sld [smem:[#allocation3 + $0x9]]
      %s645 = smax.f32 %s642, 1.0
      %v646 = vstv %s645
      %v647 = vrcp.pop %v646
      %s648 = vtos %v647
      %s649 = smul.f32 %s644, %s648
      %s650 = scalar_select %p643, %s649, 0.0
      %s651 = sadd.f32 %s638, %s650
      %s652 = scalar_select %p643, 1, 0
      %s653 = scvt.s32.f32 %s652
      %s654 = sadd.f32 %s641, %s653
      %s655 = smax.f32 %s654, 1.0
      %v656 = vstv %s655
      %v657 = vrcp.pop %v656
      %s658 = vtos %v657
      %s659 = smul.f32 %s651, %s658
      %s660 = scalar_lea.smem [#allocation10], 0
      %661 = sst [smem:[%s660]] %s659
    $region33: #{tpu_custom_call.1} parent=1 // pred_fallthru
      _
    // Predicated region
    $region34: #{tpu_custom_call.1} parent=1 // pred_check
      _
    $region35: #{tpu_custom_call.1} parent=1 // pred_check_branch
      %663 = sbr.rel (0) target = $region37
    $region36: #{tpu_custom_call.1} parent=1 // pred_region
      %s665 = ssub.s32 16, 16
      %666 = vsyncadd [#allocation6], %s665
      %669 = dma.smem_to_hbm [#allocation10], 16, %s3, [#allocation6]
    $region37: #{tpu_custom_call.1} parent=1 // pred_fallthru
      _
    // Predicated region
    $region38: #{tpu_custom_call.1} parent=1 // pred_check
      _
    $region39: #{tpu_custom_call.1} parent=1 // pred_check_branch
      %671 = sbr.rel (0) target = $region41
    $region40: #{tpu_custom_call.1} parent=1 // pred_region
      %672 = dma.done [#allocation6], 16
    $region41: #{tpu_custom_call.1} parent=1 // pred_fallthru
      _
    %673 = sfence
    %674 = vsyncpa [#allocation5], 1
    %675 = vsyncpa [#allocation8], 1
    %676 = vsyncpa [#allocation6], 1

</llo_original>
